<compile_context>
chip_gen: v7x
topology: tpu7x:2x2x1
jax: 0.10.0
libtpu: 0.0.40
codegen_flags: <defaults>
</compile_context>

<pallas_src>
import functools

import jax
import jax.numpy as jnp
from jax import lax
from jax.experimental import pallas as pl
from jax.experimental.pallas import tpu as pltpu

LANES = 128
SUBLANES = 8
ROW_ALIGN = 32          # multiple of the sublane tiling for f32/bf16/int8
MAX_TILE_ROWS = 1024    # 1024*128*4B = 512 KiB per f32 stream per block


def _cdiv(a, b):
    return -(-a // b)


def _round_up(a, m):
    return _cdiv(a, m) * m


# ----------------------------- Pallas kernel -------------------------------

def _fused_charbonnier_kernel(tile_level_ref, tile_end_ref,      # SMEM prefetch
                              pred_ref, target_ref, *rest,
                              q, eps, tile_rows, has_valid):
    """One grid step == one (tile_rows, 128) tile of one pyramid level.

    pred_ref / target_ref: (2, tile_rows, 128) VMEM blocks (channel-major).
    Outputs are per-level (8, 128) accumulators resident across the grid.
    """
    if has_valid:
        valid_ref, loss_acc_ref, valid_acc_ref = rest
    else:
        (loss_acc_ref,) = rest
        valid_ref = None
        valid_acc_ref = None

    t = pl.program_id(0)
    lvl = tile_level_ref[t]

    @pl.when(t == 0)
    def _init():
        loss_acc_ref[...] = jnp.zeros_like(loss_acc_ref)
        if has_valid:
            valid_acc_ref[...] = jnp.zeros_like(valid_acc_ref)

    # Mask out the zero-padding at the end of this tile's level (padding would
    # otherwise contribute eps**q per element).
    base = t * (tile_rows * LANES)
    row = lax.broadcasted_iota(jnp.int32, (tile_rows, LANES), 0)
    col = lax.broadcasted_iota(jnp.int32, (tile_rows, LANES), 1)
    gidx = base + row * LANES + col
    in_level = (gidx < tile_end_ref[t]).astype(jnp.float32)

    # Upcast in-registers (free VPU op; keeps HBM traffic native-dtype).
    du = pred_ref[0].astype(jnp.float32) - target_ref[0].astype(jnp.float32)
    dv = pred_ref[1].astype(jnp.float32) - target_ref[1].astype(jnp.float32)
    loss_map = jnp.power(du * du + dv * dv + eps, q)

    if has_valid:
        vmask = valid_ref[...].astype(jnp.float32) * in_level
        loss_map = loss_map * vmask
        vpart = vmask.reshape(tile_rows // SUBLANES, SUBLANES, LANES).sum(axis=0)
        valid_acc_ref[lvl] = valid_acc_ref[lvl] + vpart
    else:
        loss_map = loss_map * in_level

    # (tile_rows,128) -> (8,128) with VALU adds; the cross-lane XLU reduction
    # happens once per level in the wrapper, not once per tile.
    lpart = loss_map.reshape(tile_rows // SUBLANES, SUBLANES, LANES).sum(axis=0)
    loss_acc_ref[lvl] = loss_acc_ref[lvl] + lpart


def _fused_charbonnier_sums(level_preds, level_targets, level_valids, q, eps):
    """Per-level (loss_sum, valid_sum) for all levels from a single pallas_call.

    level_preds / level_targets: lists of (B, 2, h, w) arrays.
    level_valids: list of (B, h, w) arrays, or None (no mask)."""
    num_levels = len(level_preds)
    has_valid = level_valids is not None

    counts = [int(p.shape[0]) * int(p.shape[2]) * int(p.shape[3])
              for p in level_preds]
    max_rows = _cdiv(max(counts), LANES)
    tile_rows = max(ROW_ALIGN, min(MAX_TILE_ROWS, _round_up(max_rows, ROW_ALIGN)))
    tile_elems = tile_rows * LANES

    pred_chunks, tgt_chunks, val_chunks = [], [], []
    tile_level, tile_end = [], []
    offset = 0
    for li, (p, tgt) in enumerate(zip(level_preds, level_targets)):
        n = counts[li]
        n_tiles = _cdiv(n, tile_elems)
        padded = n_tiles * tile_elems
        pad = padded - n
        pf = jnp.transpose(p, (1, 0, 2, 3)).reshape(2, n)
        tf = jnp.transpose(tgt, (1, 0, 2, 3)).reshape(2, n)
        pred_chunks.append(jnp.pad(pf, ((0, 0), (0, pad))))
        tgt_chunks.append(jnp.pad(tf, ((0, 0), (0, pad))))
        if has_valid:
            vf = level_valids[li].reshape(n).astype(jnp.float32)
            val_chunks.append(jnp.pad(vf, (0, pad)))
        tile_level += [li] * n_tiles
        tile_end += [offset + n] * n_tiles
        offset += padded

    total = offset
    num_tiles = total // tile_elems
    rows_total = total // LANES

    pred_all = jnp.concatenate(pred_chunks, axis=1).reshape(2, rows_total, LANES)
    tgt_all = jnp.concatenate(tgt_chunks, axis=1).reshape(2, rows_total, LANES)
    tile_level_arr = jnp.asarray(tile_level, dtype=jnp.int32)
    tile_end_arr = jnp.asarray(tile_end, dtype=jnp.int32)

    kernel = functools.partial(
        _fused_charbonnier_kernel, q=float(q), eps=float(eps),
        tile_rows=tile_rows, has_valid=has_valid)

    acc_shape = jax.ShapeDtypeStruct((num_levels, SUBLANES, LANES), jnp.float32)
    acc_spec = pl.BlockSpec((num_levels, SUBLANES, LANES),
                            lambda t, lv, te: (0, 0, 0))
    flow_spec = pl.BlockSpec((2, tile_rows, LANES), lambda t, lv, te: (0, t, 0))

    in_specs = [flow_spec, flow_spec]
    inputs = [pred_all, tgt_all]
    out_shape = [acc_shape]
    out_specs = [acc_spec]
    if has_valid:
        valid_all = jnp.concatenate(val_chunks, axis=0).reshape(rows_total, LANES)
        in_specs.append(pl.BlockSpec((tile_rows, LANES), lambda t, lv, te: (t, 0)))
        inputs.append(valid_all)
        out_shape.append(acc_shape)
        out_specs.append(acc_spec)

    outs = pl.pallas_call(
        kernel,
        out_shape=tuple(out_shape),
        grid_spec=pltpu.PrefetchScalarGridSpec(
            num_scalar_prefetch=2,
            grid=(num_tiles,),
            in_specs=in_specs,
            out_specs=tuple(out_specs)),
        compiler_params=pltpu.CompilerParams(
            dimension_semantics=("arbitrary",),   # output accumulator is revisited
            vmem_limit_bytes=32 * 1024 * 1024),
    )(tile_level_arr, tile_end_arr, *inputs)

    if has_valid:
        loss_acc, valid_acc = outs
        valid_sums = jnp.sum(valid_acc, axis=(1, 2))
    else:
        loss_acc = outs[0] if isinstance(outs, (tuple, list)) else outs
        valid_sums = jnp.asarray(counts, dtype=jnp.float32)
    loss_sums = jnp.sum(loss_acc, axis=(1, 2))
    return loss_sums, valid_sums


# ------------------------------- JAX glue -----------------------------------

def _adaptive_avg_pool2d(x, oh, ow):
    # Exact match of F.adaptive_avg_pool2d when H % oh == 0 and W % ow == 0.
    B, C, H, W = x.shape
    kh, kw = H // oh, W // ow
    return x.reshape(B, C, oh, kh, ow, kw).mean(axis=(3, 5))


def _adaptive_max_pool2d(x, oh, ow):
    B, H, W = x.shape
    kh, kw = H // oh, W // ow
    return x.reshape(B, oh, kh, ow, kw).max(axis=(2, 4))


def _build_pooled_pyramid(target_div, valid_map, shapes, full_shape):
    """Pool each level from the smallest already-pooled level that it divides;
    exact when window sizes nest, and reads the full-res target only once."""
    cache = {full_shape: (target_div, valid_map)}
    for (h, w) in sorted(set(shapes), key=lambda s: -(s[0] * s[1])):
        if (h, w) in cache:
            continue
        srcs = [s for s in cache if s[0] % h == 0 and s[1] % w == 0]
        sh, sw = min(srcs, key=lambda s: s[0] * s[1])
        st, sv = cache[(sh, sw)]
        pt = _adaptive_avg_pool2d(st, h, w)
        pv = None if sv is None else _adaptive_max_pool2d(sv, h, w)
        cache[(h, w)] = (pt, pv)
    return cache


def multi_level_charbonnier_loss(preds_dict, target, valid=None, *,
                                 q=0.2, eps=0.01, flow_div=20.0,
                                 weights=None, max_flow=float('inf'),
                                 resize_flow='downsample', reduction='sum'):
    if weights is None:
        weights = dict(level6=0.32, level5=0.08, level4=0.02,
                       level3=0.01, level2=0.005)
    assert resize_flow in ('downsample', 'upsample')
    assert reduction in ('mean', 'sum')

    B, C, H, W = target.shape
    assert C == 2, f'The channels of ground truth must be 2, but got {C}'

    if valid is None:
        valid_map = None           # trivial mask: dropped from the kernel
    else:
        mag = jnp.sqrt(jnp.sum(target * target, axis=1))
        valid_map = ((valid >= 0.5) & (mag < max_flow)).astype(target.dtype)

    target_div = target / flow_div

    levels = list(weights.items())
    # TODO(synk): list-of-Tensor preds and resize_flow='upsample' (bilinear
    # interpolation of pred) are not implemented.
    shapes = [tuple(int(s) for s in preds_dict[lvl].shape[2:]) for lvl, _ in levels]

    if resize_flow == 'downsample':
        pooled = _build_pooled_pyramid(target_div, valid_map, shapes, (H, W))
    else:
        pooled = {s: (target_div, valid_map) for s in set(shapes)}

    level_preds, level_targets, level_valids = [], [], []
    for (lvl, _wgt), (h, w) in zip(levels, shapes):
        pred = preds_dict[lvl]
        ct, cv = pooled[(h, w)]
        assert pred.shape == ct.shape, (
            f'pred shape {pred.shape} does not match target shape {ct.shape}.')
        level_preds.append(pred)
        level_targets.append(ct)
        level_valids.append(cv)
    if valid is None:
        level_valids = None

    loss_sums, valid_sums = _fused_charbonnier_sums(
        level_preds, level_targets, level_valids, q, eps)

    loss = jnp.asarray(0.0, dtype=jnp.float32)
    for i, (lvl, wgt) in enumerate(levels):
        b = preds_dict[lvl].shape[0]
        if reduction == 'mean':
            loss = loss + loss_sums[i] / (valid_sums[i] + 1e-6) * wgt
        else:  # 'sum'
            loss = loss + loss_sums[i] / b * wgt
    return loss


# ------------------------------- reference ----------------------------------

def _ref_loss(preds_dict, target, valid=None, *, q, eps, flow_div, weights,
              max_flow=float('inf'), reduction='sum'):
    B = target.shape[0]
    if valid is None:
        valid_map = jnp.ones((B,) + target.shape[2:], target.dtype)
    else:
        mag = jnp.sqrt(jnp.sum(target * target, axis=1))
        valid_map = ((valid >= 0.5) & (mag < max_flow)).astype(target.dtype)
    target_div = target / flow_div
    loss = 0.0
    for level, wgt in weights.items():
        pred = preds_dict[level]
        b, _, h, w = pred.shape
        ct = _adaptive_avg_pool2d(target_div, h, w)
        cv = _adaptive_max_pool2d(valid_map, h, w)
        diff = pred - ct
        lm = (jnp.sum(diff * diff, axis=1) + eps) ** q * cv
        if reduction == 'mean':
            loss = loss + jnp.sum(lm) / (jnp.sum(cv) + 1e-6) * wgt
        else:
            loss = loss + jnp.sum(lm) / b * wgt
    return loss


# --------------------------------- main --------------------------------------

if __name__ == "__main__":
    key = jax.random.PRNGKey(0)
    B, H, W = 2, 64, 64
    weights = dict(level6=0.32, level5=0.08, level4=0.02,
                   level3=0.01, level2=0.005)
    level_sizes = dict(level6=(1, 1), level5=(2, 2), level4=(4, 4),
                       level3=(8, 8), level2=(16, 16))

    k_t, k_v, *k_levels = jax.random.split(key, 2 + len(level_sizes))
    target = 5.0 * jax.random.normal(k_t, (B, 2, H, W), dtype=jnp.float32)
    preds = {
        lvl: jax.random.normal(k, (B, 2, h, w), dtype=jnp.float32)
        for (lvl, (h, w)), k in zip(level_sizes.items(), k_levels)
    }

    # Path 1: no valid mask, reduction='sum'
    out = multi_level_charbonnier_loss(
        preds, target, valid=None,
        q=0.2, eps=0.01, flow_div=20.0, weights=weights,
        max_flow=float('inf'), resize_flow='downsample', reduction='sum')
    out = jax.block_until_ready(out)
    ref = _ref_loss(preds, target, valid=None, q=0.2, eps=0.01, flow_div=20.0,
                    weights=weights, max_flow=float('inf'), reduction='sum')
    ref = jax.block_until_ready(ref)
    assert jnp.allclose(out, ref, rtol=1e-4, atol=1e-5), (out, ref)

    # Path 2: valid mask + finite max_flow + reduction='mean'
    valid = (jax.random.uniform(k_v, (B, H, W)) > 0.3).astype(jnp.float32)
    out2 = multi_level_charbonnier_loss(
        preds, target, valid=valid,
        q=0.2, eps=0.01, flow_div=20.0, weights=weights,
        max_flow=10.0, resize_flow='downsample', reduction='mean')
    out2 = jax.block_until_ready(out2)
    ref2 = _ref_loss(preds, target, valid=valid, q=0.2, eps=0.01, flow_div=20.0,
                     weights=weights, max_flow=10.0, reduction='mean')
    ref2 = jax.block_until_ready(ref2)
    assert jnp.allclose(out2, ref2, rtol=1e-4, atol=1e-5), (out2, ref2)

    print("KERNEL_OK")
</pallas_src>

<mosaic_0001>
module attributes {stable_mosaic.version = 11 : i64} {
  func.func @_fused_charbonnier_kernel(%arg0: i32, %arg1: memref<5xi32, #tpu.memory_space<smem>>, %arg2: memref<5xi32, #tpu.memory_space<smem>>, %arg3: memref<2x32x128xf32, #tpu.memory_space<vmem>>, %arg4: memref<2x32x128xf32, #tpu.memory_space<vmem>>, %arg5: memref<5x8x128xf32, #tpu.memory_space<vmem>>) attributes {dimension_semantics = [#tpu.dimension_semantics<arbitrary>], iteration_bounds = array<i64: 5>, scalar_prefetch = 2 : i64, scratch_operands = 0 : i64, tpu.core_type = #tpu.core_type<tc>, window_params = [{transform_indices = @transform_0, window_bounds = array<i64: 2, 32, 128>}, {transform_indices = @transform_1, window_bounds = array<i64: 2, 32, 128>}, {pipeline_mode = #tpu.pipeline_mode<synchronous>, transform_indices = @transform_2, window_bounds = array<i64: 5, 8, 128>}]} {
    %0 = arith.index_cast %arg0 : i32 to index
    %1 = memref.load %arg1[%0] : memref<5xi32, #tpu.memory_space<smem>>
    %c0_i32 = arith.constant 0 : i32
    %2 = arith.cmpi eq, %arg0, %c0_i32 : i32
    %3 = arith.extui %2 : i1 to i32
    %c0_i32_0 = arith.constant 0 : i32
    %4 = arith.cmpi ne, %3, %c0_i32_0 : i32
    scf.if %4 {
      %cst_17 = arith.constant 0.000000e+00 : f32
      %47 = vector.broadcast %cst_17 : f32 to vector<5x8x128xf32>
      %c0_18 = arith.constant 0 : index
      %c0_19 = arith.constant 0 : index
      %c0_20 = arith.constant 0 : index
      %48 = vector.load %arg5[%c0_18, %c0_19, %c0_20] : memref<5x8x128xf32, #tpu.memory_space<vmem>>, vector<5x8x128xf32>
      tpu.vector_store %arg5[%c0_18, %c0_19, %c0_20], %47 {strides = array<i32>} : memref<5x8x128xf32, #tpu.memory_space<vmem>>, vector<5x8x128xf32>,
    } else {
    }
    %c4096_i32 = arith.constant 4096 : i32
    %5 = arith.muli %arg0, %c4096_i32 : i32
    %6 = tpu.iota {dimensions = array<i32: 0>} : vector<32x128xi32>
    %7 = tpu.iota {dimensions = array<i32: 1>} : vector<32x128xi32>
    %c128_i32 = arith.constant 128 : i32
    %8 = vector.broadcast %c128_i32 : i32 to vector<32x128xi32>
    %9 = arith.muli %6, %8 : vector<32x128xi32>
    %10 = vector.broadcast %5 : i32 to vector<32x128xi32>
    %11 = arith.addi %10, %9 : vector<32x128xi32>
    %12 = arith.addi %11, %7 : vector<32x128xi32>
    %13 = arith.index_cast %arg0 : i32 to index
    %14 = memref.load %arg2[%13] : memref<5xi32, #tpu.memory_space<smem>>
    %15 = vector.broadcast %14 : i32 to vector<32x128xi32>
    %16 = arith.cmpi slt, %12, %15 : vector<32x128xi32>
    %17 = arith.extui %16 : vector<32x128xi1> to vector<32x128xi32>
    %18 = arith.sitofp %17 : vector<32x128xi32> to vector<32x128xf32>
    %c0 = arith.constant 0 : index
    %c0_1 = arith.constant 0 : index
    %c0_2 = arith.constant 0 : index
    %19 = vector.load %arg3[%c0, %c0_1, %c0_2] : memref<2x32x128xf32, #tpu.memory_space<vmem>>, vector<1x32x128xf32>
    %20 = vector.shape_cast %19 : vector<1x32x128xf32> to vector<32x128xf32>
    %c0_3 = arith.constant 0 : index
    %c0_4 = arith.constant 0 : index
    %c0_5 = arith.constant 0 : index
    %21 = vector.load %arg4[%c0_3, %c0_4, %c0_5] : memref<2x32x128xf32, #tpu.memory_space<vmem>>, vector<1x32x128xf32>
    %22 = vector.shape_cast %21 : vector<1x32x128xf32> to vector<32x128xf32>
    %23 = arith.subf %20, %22 : vector<32x128xf32>
    %c1 = arith.constant 1 : index
    %c0_6 = arith.constant 0 : index
    %c0_7 = arith.constant 0 : index
    %24 = vector.load %arg3[%c1, %c0_6, %c0_7] : memref<2x32x128xf32, #tpu.memory_space<vmem>>, vector<1x32x128xf32>
    %25 = vector.shape_cast %24 : vector<1x32x128xf32> to vector<32x128xf32>
    %c1_8 = arith.constant 1 : index
    %c0_9 = arith.constant 0 : index
    %c0_10 = arith.constant 0 : index
    %26 = vector.load %arg4[%c1_8, %c0_9, %c0_10] : memref<2x32x128xf32, #tpu.memory_space<vmem>>, vector<1x32x128xf32>
    %27 = vector.shape_cast %26 : vector<1x32x128xf32> to vector<32x128xf32>
    %28 = arith.subf %25, %27 : vector<32x128xf32>
    %29 = arith.mulf %23, %23 : vector<32x128xf32>
    %30 = arith.mulf %28, %28 : vector<32x128xf32>
    %31 = arith.addf %29, %30 : vector<32x128xf32>
    %cst = arith.constant 0.00999999977 : f32
    %32 = vector.broadcast %cst : f32 to vector<32x128xf32>
    %33 = arith.addf %31, %32 : vector<32x128xf32>
    %cst_11 = arith.constant 2.000000e-01 : f32
    %34 = vector.broadcast %cst_11 : f32 to vector<32x128xf32>
    %35 = math.powf %33, %34 : vector<32x128xf32>
    %36 = arith.mulf %35, %18 : vector<32x128xf32>
    %37 = vector.shape_cast %36 : vector<32x128xf32> to vector<4x8x128xf32>
    %cst_12 = arith.constant dense<0.000000e+00> : vector<8x128xf32>
    %38 = vector.multi_reduction <add>, %37, %cst_12 [0] : vector<4x8x128xf32> to vector<8x128xf32>
    %39 = arith.index_cast %1 : i32 to index
    %c0_13 = arith.constant 0 : index
    %c0_14 = arith.constant 0 : index
    %40 = vector.load %arg5[%39, %c0_13, %c0_14] : memref<5x8x128xf32, #tpu.memory_space<vmem>>, vector<1x8x128xf32>
    %41 = vector.shape_cast %40 : vector<1x8x128xf32> to vector<8x128xf32>
    %42 = arith.addf %41, %38 : vector<8x128xf32>
    %43 = arith.index_cast %1 : i32 to index
    %c0_15 = arith.constant 0 : index
    %c0_16 = arith.constant 0 : index
    %44 = vector.load %arg5[%43, %c0_15, %c0_16] : memref<5x8x128xf32, #tpu.memory_space<vmem>>, vector<1x8x128xf32>
    %45 = vector.shape_cast %44 : vector<1x8x128xf32> to vector<8x128xf32>
    %46 = vector.shape_cast %42 : vector<8x128xf32> to vector<1x8x128xf32>
    tpu.vector_store %arg5[%43, %c0_15, %c0_16], %46 {strides = array<i32>} : memref<5x8x128xf32, #tpu.memory_space<vmem>>, vector<1x8x128xf32>,
    return
  }
  func.func @transform_0(%arg0: i32, %arg1: memref<5xi32, #tpu.memory_space<smem>>, %arg2: memref<5xi32, #tpu.memory_space<smem>>) -> (i32, i32, i32) {
    %c0_i32 = arith.constant 0 : i32
    %c0_i32_0 = arith.constant 0 : i32
    %c0_i32_1 = arith.constant 0 : i32
    return %c0_i32, %arg0, %c0_i32_0 : i32, i32, i32
  }
  func.func @transform_1(%arg0: i32, %arg1: memref<5xi32, #tpu.memory_space<smem>>, %arg2: memref<5xi32, #tpu.memory_space<smem>>) -> (i32, i32, i32) {
    %c0_i32 = arith.constant 0 : i32
    %c0_i32_0 = arith.constant 0 : i32
    %c0_i32_1 = arith.constant 0 : i32
    return %c0_i32, %arg0, %c0_i32_0 : i32, i32, i32
  }
  func.func @transform_2(%arg0: i32, %arg1: memref<5xi32, #tpu.memory_space<smem>>, %arg2: memref<5xi32, #tpu.memory_space<smem>>) -> (i32, i32, i32) {
    %c0_i32 = arith.constant 0 : i32
    %c0_i32_0 = arith.constant 0 : i32
    %c0_i32_1 = arith.constant 0 : i32
    %c0_i32_2 = arith.constant 0 : i32
    return %c0_i32, %c0_i32_0, %c0_i32_1 : i32, i32, i32
  }
}

</mosaic_0001>

<llo_original>
// kernel: tpu_custom_call.1
$region0: #{tpu_custom_call.1}
  #allocation0 [shape = 'u32[]', space=smem, size = 0x4, offset = 0x4, fixed_abs, tag = 'smem constant byte address 0x4 - core index']
  #allocation1 [shape = 'u32[144,128]{1,0:T(1,128)}', space=vmem, size = 0x12000, scoped, tag = 'internal scratch']
  #allocation2 [shape = 's32[1]{0}', space=sflag, size = 0x4, scoped, tag = 'scoped memory for tpu_custom_call.1']
  #allocation3 [shape = 'u8[512]{0}', space=smem, size = 0x200, scoped, tag = 'prefetched SMEM operand 0']
  #allocation4 [shape = 'u8[512]{0}', space=smem, size = 0x200, scoped, tag = 'prefetched SMEM operand 1']
  #allocation11 [shape = 's32[]', space=sflag, size = 0x4, offset = 0, fixed_abs, tag = 'sflag constant byte address 0x0 - dummy sync flag']
  #allocation13 [shape = 's32[]', space=sflag, size = 0x4, offset = 0, fixed_abs, tag = 'sflag constant byte address 0x0 - dummy sync flag']
  %s0 = inlined_call_operand.hbm [shape: s32[5], index: 0, kind: input, shape index: {}]
  %s1 = inlined_call_operand.vmem [shape: s32[5], index: 1, kind: input, shape index: {}]
  %s2 = inlined_call_operand.hbm [shape: f32[2,160,128], index: 2, kind: input, shape index: {}]
  %s3 = inlined_call_operand.hbm [shape: f32[2,160,128], index: 3, kind: input, shape index: {}]
  %s4 = inlined_call_operand.hbm [shape: f32[5,8,128], index: 4, kind: output, shape index: {}]
  %s5 = sld [smem:[#allocation0]]
  $region53: #{tpu_custom_call.1} parent=0
    _
  %s7 = ssub.s32 1, %s5
  %s8 = scalar_select 0, %s7, %s5
  %10 = dma.hbm_to_smem %s0, 16, [#allocation3], [#allocation2]
  %s11 = sshll.u32 %s1, 4
  %s12 = int_to_ptr.vmem [resolvable:$true] %s11
  %14 = dma.vmem_to_smem %s12, 16, [#allocation4], [#allocation2]
  %15 = dma.done [#allocation2], 32
  %16 = sfence
  $region1: #{tpu_custom_call.1} parent=0
    #allocation5 [shape = 'u8[65536]{0}', space=vmem, size = 0x10000, scoped, tag = 'input window, operand 2']
    #allocation6 [shape = 's32[2]{0}', space=sflag, size = 0x8, scoped, tag = 'scoped memory for tpu_custom_call.1']
    #allocation7 [shape = 's32[2]{0}', space=sflag, size = 0x8, scoped, tag = 'scoped memory for tpu_custom_call.1']
    #allocation8 [shape = 'u8[65536]{0}', space=vmem, size = 0x10000, scoped, tag = 'input window, operand 3']
    #allocation9 [shape = 's32[2]{0}', space=sflag, size = 0x8, scoped, tag = 'scoped memory for tpu_custom_call.1']
    #allocation10 [shape = 'u8[20480]{0}', space=vmem, size = 0x5000, scoped, tag = 'output window, operand 0, single buffered']
    %17 = vsyncpa [#allocation6], 0
    %s18 = scalar_lea.sflag [#allocation6], 1
    %19 = vsyncpa %s18, 0
    %20 = vsyncpa [#allocation9], 0
    %s21 = scalar_lea.sflag [#allocation9], 1
    %22 = vsyncpa %s21, 0
    %23 = vsyncpa [#allocation7], 0
    loop: start=0, step=1, limit=7
    $region2: #{tpu_custom_call.1} parent=1 // loop_pre_header
      _
    $region3: #{tpu_custom_call.1} parent=1 // loop_header
      %s25 = sphi 0, %s29
      %p26 = scmp.ge.s32.totalorder %s25, 7
      %s35 = sphi 0, %s37
      %s38 = sphi 0, %s35
      %s39 = sphi 0, %s38
      %s55 = sphi 0, %s39
      %s61 = sphi 0, %s63
      %s64 = sphi 0, %s61
      %s65 = sphi 0, %s64
      %s81 = sphi 0, %s65
      %s85 = sphi 0, %s85
      %s87 = sphi 0, %s85
      %s88 = sphi 0, %s87
      %s102 = sphi 0, %s88
    $region4: #{tpu_custom_call.1} parent=1 // loop_header_branch
      %28 = sbr.rel (%p26) target = $region8
    $region5: #{tpu_custom_call.1} parent=1 // loop_body
      %s30 = ssub.s32 %s25, 1
      %s31 = ssub.s32 %s25, 2
      %s32 = sadd.s32 %s25, 1
      %s33 = ssub.s32 %s25, %s32
      %p34 = scmp.eq.s32.totalorder %s33, 0
      %s36 = sadd.s32 %s35, 1
      %s37 = scalar_select %p34, %s35, %s36
      %p40 = pneg %p34
      %p41 = scmp.eq.s32.totalorder %s25, 4
      %p42 = por %p40, %p41
      %p43 = scmp.ne.s32.totalorder %s35, %s38
      %p44 = scmp.eq.s32.totalorder %s25, 0
      %p45 = por %p43, %p44
      %p46 = scmp.ne.s32.totalorder %s35, %s38
      %p47 = scmp.eq.s32.totalorder %s30, 4
      %p48 = por %p46, %p47
      %p49 = scmp.ne.s32.totalorder %s38, %s39
      %p50 = scmp.eq.s32.totalorder %s30, 0
      %p51 = por %p49, %p50
      %p52 = scmp.ne.s32.totalorder %s38, %s39
      %p53 = scmp.eq.s32.totalorder %s31, 4
      %p54 = por %p52, %p53
      %p56 = scmp.ne.s32.totalorder %s39, %s55
      %p57 = scmp.eq.s32.totalorder %s31, 0
      %p58 = por %p56, %p57
      %s59 = ssub.s32 %s25, %s32
      %p60 = scmp.eq.s32.totalorder %s59, 0
      %s62 = sadd.s32 %s61, 1
      %s63 = scalar_select %p60, %s61, %s62
      %p66 = pneg %p60
      %p67 = scmp.eq.s32.totalorder %s25, 4
      %p68 = por %p66, %p67
      %p69 = scmp.ne.s32.totalorder %s61, %s64
      %p70 = scmp.eq.s32.totalorder %s25, 0
      %p71 = por %p69, %p70
      %p72 = scmp.ne.s32.totalorder %s61, %s64
      %p73 = scmp.eq.s32.totalorder %s30, 4
      %p74 = por %p72, %p73
      %p75 = scmp.ne.s32.totalorder %s64, %s65
      %p76 = scmp.eq.s32.totalorder %s30, 0
      %p77 = por %p75, %p76
      %p78 = scmp.ne.s32.totalorder %s64, %s65
      %p79 = scmp.eq.s32.totalorder %s31, 4
      %p80 = por %p78, %p79
      %p82 = scmp.ne.s32.totalorder %s65, %s81
      %p83 = scmp.eq.s32.totalorder %s31, 0
      %p84 = por %p82, %p83
      %s86 = sadd.s32 %s85, 1
      %p89 = scmp.eq.s32.totalorder %s25, 4
      %p90 = scmp.ne.s32.totalorder %s85, %s87
      %p91 = scmp.eq.s32.totalorder %s25, 0
      %p92 = por %p90, %p91
      %p93 = scmp.ne.s32.totalorder %s85, %s87
      %p94 = scmp.eq.s32.totalorder %s30, 4
      %p95 = por %p93, %p94
      %p96 = scmp.ne.s32.totalorder %s87, %s88
      %p97 = scmp.eq.s32.totalorder %s30, 0
      %p98 = por %p96, %p97
      %p99 = scmp.ne.s32.totalorder %s87, %s88
      %p100 = scmp.eq.s32.totalorder %s31, 4
      %p101 = por %p99, %p100
      %p103 = scmp.ne.s32.totalorder %s88, %s102
      %p104 = scmp.eq.s32.totalorder %s31, 0
      %p105 = por %p103, %p104
      %p106 = scmp.le.s32.totalorder 1, %s25
      %p107 = scmp.lt.s32.totalorder %s25, 6
      %p108 = pnand %p106, %p107
      %p109 = pneg %p108
      // Predicated region
      $region9: #{tpu_custom_call.1} parent=5 // pred_check
        _
      $region10: #{tpu_custom_call.1} parent=5 // pred_check_branch
        %111 = sbr.rel (%p108) target = $region12
      $region11: #{tpu_custom_call.1} parent=5 // pred_region
        %s112 = ssub.s32 %s25, 1
      $region12: #{tpu_custom_call.1} parent=5 // pred_fallthru
        _
      %p113 = scmp.lt.s32.totalorder %s25, 5
      // Predicated region
      $region13: #{tpu_custom_call.1} parent=5 // pred_check
        %p114 = pneg %p113
      $region14: #{tpu_custom_call.1} parent=5 // pred_check_branch
        %116 = sbr.rel (%p114) target = $region16
      $region15: #{tpu_custom_call.1} parent=5 // pred_region
        // Predicated region
        $region17: #{tpu_custom_call.1} parent=15 // pred_check
          %p117 = pneg %p45
        $region18: #{tpu_custom_call.1} parent=15 // pred_check_branch
          %119 = sbr.rel (%p117) target = $region20
        $region19: #{tpu_custom_call.1} parent=15 // pred_region
          #allocation12 [shape = 'u32[6]{0}', space=smem, size = 0x18, scoped, tag = 'DMA stride descriptor']
          %s120 = sand.u32 %s35, 1
          %s121 = scalar_lea.sflag [#allocation6], %s120
          %s122 = sand.u32 %s35, 1
          %s123 = smul.addr %s122, 64
          %s124 = scalar_lea.vmem [#allocation5], %s123
          %s125 = smul.u32 4, %s25
          %s127 = ssub.s32 1024, 1024
          %128 = vsyncadd %s121, %s127
          %s129 = smul.addr %s125, 128
          %s130 = scalar_lea.hbm %s2, %s129
          %s132 = sshll.u32 1, 14
          %s133 = sxor.u32 4294967295, %s132
          %s135 = sld [smem:[#allocation0]]
          %s136 = sadd.s32 2, %s135
          %s138 = sshll.u32 7, 26
          %s139 = sxor.u32 4294967295, %s138
          %s140 = sand.u32 0, %s139
          %s141 = sshll.u32 %s136, 26
          %s142 = sor.u32 %s140, %s141
          %s143 = sshll.u32 %s124, 4
          %s144 = int_to_ptr.vmem [resolvable:$true] %s143
          %150 = sst [smem:[#allocation12]] 2560
          %s151 = scalar_lea.smem [#allocation12], 1
          %152 = sst [smem:[%s151]] 512
          %s153 = scalar_lea.smem [#allocation12], 2
          %154 = sst [smem:[%s153]] 4
          %s155 = scalar_lea.smem [#allocation12], 3
          %156 = sst [smem:[%s155]] 128
          %s157 = scalar_lea.smem [#allocation12], 4
          %158 = sst [smem:[%s157]] 128
          %s159 = scalar_lea.smem [#allocation12], 5
          %160 = sst [smem:[%s159]] 8
          %162 = dma.general %s130, 1024, %s144, %s121, [#allocation11], [#allocation12], %s142, 0
        $region20: #{tpu_custom_call.1} parent=15 // pred_fallthru
          _
        // Predicated region
        $region21: #{tpu_custom_call.1} parent=15 // pred_check
          %p163 = pneg %p71
        $region22: #{tpu_custom_call.1} parent=15 // pred_check_branch
          %165 = sbr.rel (%p163) target = $region24
        $region23: #{tpu_custom_call.1} parent=15 // pred_region
          #allocation14 [shape = 'u32[6]{0}', space=smem, size = 0x18, scoped, tag = 'DMA stride descriptor']
          %s166 = sand.u32 %s61, 1
          %s167 = scalar_lea.sflag [#allocation9], %s166
          %s168 = sand.u32 %s61, 1
          %s169 = smul.addr %s168, 64
          %s170 = scalar_lea.vmem [#allocation8], %s169
          %s171 = smul.u32 4, %s25
          %s173 = ssub.s32 1024, 1024
          %174 = vsyncadd %s167, %s173
          %s175 = smul.addr %s171, 128
          %s176 = scalar_lea.hbm %s3, %s175
          %s178 = sshll.u32 1, 14
          %s179 = sxor.u32 4294967295, %s178
          %s181 = sld [smem:[#allocation0]]
          %s182 = sadd.s32 2, %s181
          %s184 = sshll.u32 7, 26
          %s185 = sxor.u32 4294967295, %s184
          %s186 = sand.u32 0, %s185
          %s187 = sshll.u32 %s182, 26
          %s188 = sor.u32 %s186, %s187
          %s189 = sshll.u32 %s170, 4
          %s190 = int_to_ptr.vmem [resolvable:$true] %s189
          %196 = sst [smem:[#allocation14]] 2560
          %s197 = scalar_lea.smem [#allocation14], 1
          %198 = sst [smem:[%s197]] 512
          %s199 = scalar_lea.smem [#allocation14], 2
          %200 = sst [smem:[%s199]] 4
          %s201 = scalar_lea.smem [#allocation14], 3
          %202 = sst [smem:[%s201]] 128
          %s203 = scalar_lea.smem [#allocation14], 4
          %204 = sst [smem:[%s203]] 128
          %s205 = scalar_lea.smem [#allocation14], 5
          %206 = sst [smem:[%s205]] 8
          %208 = dma.general %s176, 1024, %s190, %s167, [#allocation13], [#allocation14], %s188, 0
        $region24: #{tpu_custom_call.1} parent=15 // pred_fallthru
          _
      $region16: #{tpu_custom_call.1} parent=5 // pred_fallthru
        _
      %p209 = scmp.le.s32.totalorder 1, %s25
      %p210 = scmp.lt.s32.totalorder %s25, 6
      %p211 = pnand %p209, %p210
      %p212 = pneg %p211
      // Predicated region
      $region25: #{tpu_custom_call.1} parent=5 // pred_check
        _
      $region26: #{tpu_custom_call.1} parent=5 // pred_check_branch
        %214 = sbr.rel (%p211) target = $region28
      $region27: #{tpu_custom_call.1} parent=5 // pred_region
        %s215 = ssub.s32 %s25, 1
        %s216 = sand.u32 %s38, 1
        %s217 = scalar_lea.sflag [#allocation6], %s216
        %s218 = sand.u32 %s38, 1
        %s219 = smul.addr %s218, 64
        %s220 = scalar_lea.vmem [#allocation5], %s219
        // Predicated region
        $region29: #{tpu_custom_call.1} parent=27 // pred_check
          %p221 = pneg %p51
        $region30: #{tpu_custom_call.1} parent=27 // pred_check_branch
          %223 = sbr.rel (%p221) target = $region32
        $region31: #{tpu_custom_call.1} parent=27 // pred_region
          %224 = dma.done %s217, 1024
        $region32: #{tpu_custom_call.1} parent=27 // pred_fallthru
          _
        %s225 = sand.u32 %s64, 1
        %s226 = scalar_lea.sflag [#allocation9], %s225
        %s227 = sand.u32 %s64, 1
        %s228 = smul.addr %s227, 64
        %s229 = scalar_lea.vmem [#allocation8], %s228
        // Predicated region
        $region33: #{tpu_custom_call.1} parent=27 // pred_check
          %p230 = pneg %p77
        $region34: #{tpu_custom_call.1} parent=27 // pred_check_branch
          %232 = sbr.rel (%p230) target = $region36
        $region35: #{tpu_custom_call.1} parent=27 // pred_region
          %233 = dma.done %s226, 1024
        $region36: #{tpu_custom_call.1} parent=27 // pred_fallthru
          _
        %s234 = sand.u32 %s38, 1
        %s235 = scalar_lea.sflag [#allocation6], %s234
        %s236 = sand.u32 %s38, 1
        %s237 = smul.addr %s236, 64
        %s238 = scalar_lea.vmem [#allocation5], %s237
        %p239 = pneg %p51
        %p240 = pneg %p48
        %s241 = sand.u32 %s64, 1
        %s242 = scalar_lea.sflag [#allocation9], %s241
        %s243 = sand.u32 %s64, 1
        %s244 = smul.addr %s243, 64
        %s245 = scalar_lea.vmem [#allocation8], %s244
        %p246 = pneg %p77
        %p247 = pneg %p74
        %p248 = pneg %p98
        %p249 = pneg %p95
        %s250 = smul.u32 4, %s30
        %s251 = smul.u32 4, %s30
        %s252 = sld [smem:[#allocation3 + %s30]]
        %p253 = scmp.eq.s32.totalorder %s30, 0
        // Predicated region
        $region37: #{tpu_custom_call.1} parent=27 // pred_check
          %p254 = pneg %p253
        $region38: #{tpu_custom_call.1} parent=27 // pred_check_branch
          %256 = sbr.rel (%p254) target = $region40
        $region39: #{tpu_custom_call.1} parent=27 // pred_region
          %257 = vst [vmem:[#allocation10] sm:$0xff] 0.0
          %258 = vst [vmem:[#allocation10 + $0x8] sm:$0xff] 0.0
          %259 = vst [vmem:[#allocation10 + $0x10] sm:$0xff] 0.0
          %260 = vst [vmem:[#allocation10 + $0x18] sm:$0xff] 0.0
          %261 = vst [vmem:[#allocation10 + $0x20] sm:$0xff] 0.0
        $region40: #{tpu_custom_call.1} parent=27 // pred_fallthru
          _
        %s262 = smul.u32 %s30, 4096
        %v263 = vlaneseq
        %v264 = vshrl.u32 %v263, 7
        %v265 = vadd.s32 %v264, 8
        %v266 = vadd.s32 %v264, 16
        %v267 = vadd.s32 %v264, 24
        %v268 = vlaneseq
        %v269 = vand.u32 %v268, 127
        %v270 = vmul.u32 %v264, 128
        %v271 = vmul.u32 %v265, 128
        %v272 = vmul.u32 %v266, 128
        %v273 = vmul.u32 %v267, 128
        %v274 = vstv %s262
        %v275 = vadd.s32 %v274, %v270
        %v276 = vadd.s32 %v274, %v271
        %v277 = vadd.s32 %v274, %v272
        %v278 = vadd.s32 %v274, %v273
        %v279 = vadd.s32 %v275, %v269
        %v280 = vadd.s32 %v276, %v269
        %v281 = vadd.s32 %v277, %v269
        %v282 = vadd.s32 %v278, %v269
        %s283 = sld [smem:[#allocation4 + %s30]]
        %v284 = vstv %s283
        %vm285 = vcmp.lt.s32.totalorder %v279, %v284
        %vm286 = vcmp.lt.s32.totalorder %v280, %v284
        %vm287 = vcmp.lt.s32.totalorder %v281, %v284
        %vm288 = vcmp.lt.s32.totalorder %v282, %v284
        %v289 = vsel %vm285, 1, 0
        %v290 = vsel %vm286, 1, 0
        %v291 = vsel %vm287, 1, 0
        %v292 = vsel %vm288, 1, 0
        %v293 = vcvt.s32.f32 %v289
        %v294 = vcvt.s32.f32 %v290
        %v295 = vcvt.s32.f32 %v291
        %v296 = vcvt.s32.f32 %v292
        %v297 = vld [vmem:[%s220] sm:$0xff]
        %v298 = vld [vmem:[%s220 + $0x8] sm:$0xff]
        %v299 = vld [vmem:[%s220 + $0x10] sm:$0xff]
        %v300 = vld [vmem:[%s220 + $0x18] sm:$0xff]
        %v301 = vld [vmem:[%s229] sm:$0xff]
        %v302 = vld [vmem:[%s229 + $0x8] sm:$0xff]
        %v303 = vld [vmem:[%s229 + $0x10] sm:$0xff]
        %v304 = vld [vmem:[%s229 + $0x18] sm:$0xff]
        %v305 = vsub.f32 %v297, %v301
        %v306 = vsub.f32 %v298, %v302
        %v307 = vsub.f32 %v299, %v303
        %v308 = vsub.f32 %v300, %v304
        %s309 = scalar_lea.vmem %s220, 32 [#allocation5]
        %v310 = vld [vmem:[%s309] sm:$0xff]
        %v311 = vld [vmem:[%s309 + $0x8] sm:$0xff]
        %v312 = vld [vmem:[%s309 + $0x10] sm:$0xff]
        %v313 = vld [vmem:[%s309 + $0x18] sm:$0xff]
        %s314 = scalar_lea.vmem %s229, 32 [#allocation8]
        %v315 = vld [vmem:[%s314] sm:$0xff]
        %v316 = vld [vmem:[%s314 + $0x8] sm:$0xff]
        %v317 = vld [vmem:[%s314 + $0x10] sm:$0xff]
        %v318 = vld [vmem:[%s314 + $0x18] sm:$0xff]
        %v319 = vsub.f32 %v310, %v315
        %v320 = vsub.f32 %v311, %v316
        %v321 = vsub.f32 %v312, %v317
        %v322 = vsub.f32 %v313, %v318
        %v323 = vmul.f32 %v305, %v305
        %v324 = vmul.f32 %v306, %v306
        %v325 = vmul.f32 %v307, %v307
        %v326 = vmul.f32 %v308, %v308
        %v327 = vmul.f32 %v319, %v319
        %v328 = vmul.f32 %v320, %v320
        %v329 = vmul.f32 %v321, %v321
        %v330 = vmul.f32 %v322, %v322
        %v331 = vadd.f32 %v323, %v327
        %v332 = vadd.f32 %v324, %v328
        %v333 = vadd.f32 %v325, %v329
        %v334 = vadd.f32 %v326, %v330
        %v335 = vadd.f32 %v331, 0.01
        %v336 = vadd.f32 %v332, 0.01
        %v337 = vadd.f32 %v333, 0.01
        %v338 = vadd.f32 %v334, 0.01
        %v339 = vpow.f32 %v335, 0.2
        %v340 = vpow.f32 %v336, 0.2
        %v341 = vpow.f32 %v337, 0.2
        %v342 = vpow.f32 %v338, 0.2
        %v343 = vmul.f32 %v339, %v293
        %v344 = vmul.f32 %v340, %v294
        %v345 = vmul.f32 %v341, %v295
        %v346 = vmul.f32 %v342, %v296
        %v347 = vadd.f32 %v343, %v344
        %v348 = vadd.f32 %v347, %v345
        %v349 = vadd.f32 %v348, %v346
        %s350 = smul.u32 %s252, 8
        %s351 = scalar_lea.vmem [#allocation10], %s350
        %v352 = vld [vmem:[%s351] sm:$0xff]
        %v353 = vadd.f32 %v352, %v349
        %354 = vst [vmem:[%s351] sm:$0xff] %v353
        // Predicated region
        $region41: #{tpu_custom_call.1} parent=27 // pred_check
          %p355 = pneg %p95
        $region42: #{tpu_custom_call.1} parent=27 // pred_check_branch
          %357 = sbr.rel (%p355) target = $region44
        $region43: #{tpu_custom_call.1} parent=27 // pred_region
          %s359 = ssub.s32 640, 640
          %360 = vsyncadd [#allocation7], %s359
          %s361 = sshll.u32 [#allocation10], 4
          %s362 = int_to_ptr.vmem [resolvable:$true] %s361
          %367 = dma.vmem_to_hbm [thread:$0]  %s362, 640, %s4, [#allocation7], 128, 128, 8
        $region44: #{tpu_custom_call.1} parent=27 // pred_fallthru
          _
        // Predicated region
        $region45: #{tpu_custom_call.1} parent=27 // pred_check
          %p368 = pneg %p95
        $region46: #{tpu_custom_call.1} parent=27 // pred_check_branch
          %370 = sbr.rel (%p368) target = $region48
        $region47: #{tpu_custom_call.1} parent=27 // pred_region
          %371 = dma.done [#allocation7], 640
        $region48: #{tpu_custom_call.1} parent=27 // pred_fallthru
          _
      $region28: #{tpu_custom_call.1} parent=5 // pred_fallthru
        _
      %p372 = scmp.le.s32.totalorder 2, %s25
      // Predicated region
      $region49: #{tpu_custom_call.1} parent=5 // pred_check
        %p373 = pneg %p372
      $region50: #{tpu_custom_call.1} parent=5 // pred_check_branch
        %375 = sbr.rel (%p373) target = $region52
      $region51: #{tpu_custom_call.1} parent=5 // pred_region
        %s376 = ssub.s32 %s25, 2
      $region52: #{tpu_custom_call.1} parent=5 // pred_fallthru
        _
    $region6: #{tpu_custom_call.1} parent=1 // loop_footer
      %s29 = sadd.s32 1, %s25
    $region7: #{tpu_custom_call.1} parent=1 // loop_footer_branch
      %24 = sbr.rel target = $region3
    $region8: #{tpu_custom_call.1} parent=1 // loop_exit
      _
    %377 = vsyncpa [#allocation6], 1
    %s378 = scalar_lea.sflag [#allocation6], 1
    %379 = vsyncpa %s378, 1
    %380 = vsyncpa [#allocation9], 1
    %s381 = scalar_lea.sflag [#allocation9], 1
    %382 = vsyncpa %s381, 1
    %383 = vsyncpa [#allocation7], 1
    %s384 = scalar_lea.sflag [#allocation7], 1
    %385 = vsyncpa %s384, 1

</llo_original>
